<compile_context>
chip_gen: v7x
topology: tpu7x:2x2x1
jax: 0.10.0
libtpu: 0.0.40
codegen_flags: <defaults>
</compile_context>

<pallas_src>
import functools

import jax
import jax.numpy as jnp
from jax import lax
from jax.experimental import pallas as pl
from jax.experimental.pallas import tpu as pltpu


def _resblock_kernel(x_ref, mask_ref, w1_ref, b1_ref, w2_ref, b2_ref, o_ref,
                     *, H, W, K):
    """Fused ResBlock forward for one image.

    x_ref:    (1, Cin, H*W)        input, channels on sublanes, flat spatial on lanes
    mask_ref: (K*K, H*W)           1.0 where the shifted source pixel is inside the
                                   image for that tap, 0.0 in the zero-pad halo
                                   (stored in the MXU dtype -> single multiply)
    w1_ref:   (Cmid, K*K*Cin)      conv1 weights (BN1 scale folded), MXU dtype,
                                   flattened in (kh, kw, ci) tap order
    b1_ref:   (Cmid, 1) f32        folded BN1 bias
    w2_ref:   (Cout, K*K*Cmid)     conv2 weights (BN2 scale folded), MXU dtype
    b2_ref:   (Cout, 1) f32        folded BN2 bias
    o_ref:    (1, Cout, H*W)       output, lane-dense store
    """
    HW = H * W
    r = K // 2
    mxu_dtype = w1_ref.dtype

    def im2col(src):
        # src: (C, HW) in MXU dtype.  Build the (K*K*C, HW) column matrix for a
        # "same"-padded KxK conv: lane-rotate the flattened image per tap (XLU),
        # zero the wrapped halo with a precomputed mask multiply (VPU), stack
        # the taps along the sublane/contraction axis.
        taps = []
        for kh in range(K):
            for kw in range(K):
                t = kh * K + kw
                d = (kh - r) * W + (kw - r)          # flat source offset
                if d == 0:
                    taps.append(src)                 # centre tap: no shift/mask
                else:
                    rolled = pltpu.roll(src, shift=(-d) % HW, axis=1)
                    m = mask_ref[pl.ds(t, 1), :]     # (1, HW), static slice
                    taps.append(rolled * m)
        return jnp.concatenate(taps, axis=0)         # (K*K*C, HW)

    x = x_ref[0].astype(mxu_dtype)                   # cast once

    # conv1 + folded BN1: single MXU matmul over the 9*Cin contraction dim.
    y1 = jnp.dot(w1_ref[...], im2col(x),
                 preferred_element_type=jnp.float32) + b1_ref[...]
    y1 = jnp.clip(y1, 0.0, 6.0)                      # ReLU6

    # conv2 + folded BN2 (no activation).
    y2 = jnp.dot(w2_ref[...], im2col(y1.astype(mxu_dtype)),
                 preferred_element_type=jnp.float32) + b2_ref[...]

    o_ref[0] = y2.astype(o_ref.dtype)                # lane-dense store


def resblock_pallas(x, params, *, eps=1e-5, mxu_dtype=jnp.bfloat16):
    """ResBlock forward.  x: (N, Cin, H, W) NCHW float; returns (N, Cout, H, W)."""
    w1, w2 = params["w1"], params["w2"]
    N, Cin, H, W = x.shape
    Cmid, _, K, _ = w1.shape
    Cout = w2.shape[0]
    HW = H * W
    r = K // 2
    assert K % 2 == 1, "odd kernel size / stride 1 only"

    # ---- fold BatchNorm (inference stats) into conv weights; keep only biases --
    s1 = params["g1"] / jnp.sqrt(params["v1"] + eps)
    b1 = params["be1"] - params["m1"] * s1
    s2 = params["g2"] / jnp.sqrt(params["v2"] + eps)
    b2 = params["be2"] - params["m2"] * s2
    # (Co, Ci, K, K) * scale[Co] -> (Co, K*K*Ci) flattened in (kh, kw, ci) order,
    # matching the in-kernel im2col stacking: one MXU lhs operand per conv.
    w1f = (w1 * s1[:, None, None, None]).transpose(0, 2, 3, 1).reshape(Cmid, K * K * Cin)
    w2f = (w2 * s2[:, None, None, None]).transpose(0, 2, 3, 1).reshape(Cout, K * K * Cmid)

    # ---- per-tap validity masks for the zero-pad halo (computed once) ---------
    hh = jnp.arange(H)[:, None]
    ww = jnp.arange(W)[None, :]
    masks = []
    for kh in range(K):
        for kw in range(K):
            dh, dw = kh - r, kw - r
            valid = ((hh + dh >= 0) & (hh + dh < H) &
                     (ww + dw >= 0) & (ww + dw < W))
            masks.append(valid.reshape(HW))
    tap_mask = jnp.stack(masks, axis=0).astype(mxu_dtype)         # (K*K, HW)

    # ---- layout: channel-first with flattened spatial; free reshape, no pad ---
    x_flat = x.reshape(N, Cin, HW)

    kernel = functools.partial(_resblock_kernel, H=H, W=W, K=K)
    out = pl.pallas_call(
        kernel,
        out_shape=jax.ShapeDtypeStruct((N, Cout, HW), x.dtype),
        grid_spec=pltpu.PrefetchScalarGridSpec(
            num_scalar_prefetch=0,
            grid=(N,),
            in_specs=[
                pl.BlockSpec((1, Cin, HW), lambda n: (n, 0, 0)),
                pl.BlockSpec((K * K, HW), lambda n: (0, 0)),
                pl.BlockSpec((Cmid, K * K * Cin), lambda n: (0, 0)),
                pl.BlockSpec((Cmid, 1), lambda n: (0, 0)),
                pl.BlockSpec((Cout, K * K * Cmid), lambda n: (0, 0)),
                pl.BlockSpec((Cout, 1), lambda n: (0, 0)),
            ],
            out_specs=pl.BlockSpec((1, Cout, HW), lambda n: (n, 0, 0)),
        ),
        compiler_params=pltpu.CompilerParams(
            dimension_semantics=("parallel",),
            vmem_limit_bytes=32 * 1024 * 1024,
        ),
    )(x_flat,
      tap_mask,
      w1f.astype(mxu_dtype),
      b1.reshape(Cmid, 1).astype(jnp.float32),
      w2f.astype(mxu_dtype),
      b2.reshape(Cout, 1).astype(jnp.float32))

    return out.reshape(N, Cout, H, W)               # free reshape, no transpose


def resblock_reference(x, params, *, eps=1e-5, cast_dtype=None):
    """Pure-JAX reference (lax.conv).  cast_dtype mimics the kernel's MXU-operand
    rounding (None = pure f32)."""
    def cast(a):
        return a if cast_dtype is None else a.astype(cast_dtype).astype(jnp.float32)

    s1 = params["g1"] / jnp.sqrt(params["v1"] + eps)
    b1 = params["be1"] - params["m1"] * s1
    s2 = params["g2"] / jnp.sqrt(params["v2"] + eps)
    b2 = params["be2"] - params["m2"] * s2
    w1f = cast(params["w1"] * s1[:, None, None, None])
    w2f = cast(params["w2"] * s2[:, None, None, None])

    y = lax.conv_general_dilated(
        cast(x.astype(jnp.float32)), w1f, (1, 1), "SAME",
        dimension_numbers=("NCHW", "OIHW", "NCHW"),
        precision=lax.Precision.HIGHEST)
    y = jnp.clip(y + b1[None, :, None, None], 0.0, 6.0)
    z = lax.conv_general_dilated(
        cast(y), w2f, (1, 1), "SAME",
        dimension_numbers=("NCHW", "OIHW", "NCHW"),
        precision=lax.Precision.HIGHEST)
    return z + b2[None, :, None, None]


if __name__ == "__main__":
    key = jax.random.PRNGKey(0)
    N, Cin, Cmid, Cout, H, W, K = 2, 4, 4, 8, 16, 16, 3
    ks = jax.random.split(key, 12)

    x = jax.random.normal(ks[0], (N, Cin, H, W), jnp.float32)
    params = dict(
        # conv1 (Cin -> Cmid) + BN1, conv2 (Cmid -> Cout) + BN2; PyTorch layouts.
        w1=jax.random.normal(ks[1], (Cmid, Cin, K, K), jnp.float32) * 0.2,
        g1=1.0 + 0.1 * jax.random.normal(ks[2], (Cmid,), jnp.float32),
        be1=0.1 * jax.random.normal(ks[3], (Cmid,), jnp.float32),
        m1=0.1 * jax.random.normal(ks[4], (Cmid,), jnp.float32),
        v1=jnp.abs(jax.random.normal(ks[5], (Cmid,), jnp.float32)) + 0.5,
        w2=jax.random.normal(ks[6], (Cout, Cmid, K, K), jnp.float32) * 0.2,
        g2=1.0 + 0.1 * jax.random.normal(ks[7], (Cout,), jnp.float32),
        be2=0.1 * jax.random.normal(ks[8], (Cout,), jnp.float32),
        m2=0.1 * jax.random.normal(ks[9], (Cout,), jnp.float32),
        v2=jnp.abs(jax.random.normal(ks[10], (Cout,), jnp.float32)) + 0.5,
    )

    # 1) strict structural check: f32 MXU operands vs. pure-f32 reference.
    out_f32 = jax.block_until_ready(resblock_pallas(x, params, mxu_dtype=jnp.float32))
    ref_f32 = jax.block_until_ready(resblock_reference(x, params, cast_dtype=None))
    assert out_f32.shape == (N, Cout, H, W)
    assert jnp.allclose(out_f32, ref_f32, atol=2e-2, rtol=2e-2), "f32 mismatch vs reference"

    # 2) performance configuration: bf16 MXU operands / f32 accumulation, compared
    #    against a reference applying the same bf16 rounding (loose tolerance only
    #    absorbs bf16 rounding-boundary flips of the intermediate activation).
    out_bf16 = jax.block_until_ready(resblock_pallas(x, params, mxu_dtype=jnp.bfloat16))
    ref_bf16 = jax.block_until_ready(resblock_reference(x, params, cast_dtype=jnp.bfloat16))
    assert out_bf16.shape == (N, Cout, H, W)
    assert jnp.allclose(out_bf16, ref_bf16, atol=5e-2, rtol=5e-2), "bf16 mismatch vs reference"

    print("KERNEL_OK")
</pallas_src>

<mosaic_0001>
module attributes {stable_mosaic.version = 11 : i64} {
  func.func @_resblock_kernel(%arg0: i32, %arg1: memref<1x4x256xf32, #tpu.memory_space<vmem>>, %arg2: memref<9x256xf32, #tpu.memory_space<vmem>>, %arg3: memref<4x36xf32, #tpu.memory_space<vmem>>, %arg4: memref<4x1xf32, #tpu.memory_space<vmem>>, %arg5: memref<8x36xf32, #tpu.memory_space<vmem>>, %arg6: memref<8x1xf32, #tpu.memory_space<vmem>>, %arg7: memref<1x8x256xf32, #tpu.memory_space<vmem>>) attributes {dimension_semantics = [#tpu.dimension_semantics<parallel>], iteration_bounds = array<i64: 2>, scalar_prefetch = 0 : i64, scratch_operands = 0 : i64, tpu.core_type = #tpu.core_type<tc>, window_params = [{transform_indices = @transform_0, window_bounds = array<i64: 1, 4, 256>}, {pipeline_mode = #tpu.pipeline_mode<synchronous>, transform_indices = @transform_1, window_bounds = array<i64: 9, 256>}, {pipeline_mode = #tpu.pipeline_mode<synchronous>, transform_indices = @transform_2, window_bounds = array<i64: 4, 36>}, {pipeline_mode = #tpu.pipeline_mode<synchronous>, transform_indices = @transform_3, window_bounds = array<i64: 4, 1>}, {pipeline_mode = #tpu.pipeline_mode<synchronous>, transform_indices = @transform_4, window_bounds = array<i64: 8, 36>}, {pipeline_mode = #tpu.pipeline_mode<synchronous>, transform_indices = @transform_5, window_bounds = array<i64: 8, 1>}, {transform_indices = @transform_6, window_bounds = array<i64: 1, 8, 256>}]} {
    %c0 = arith.constant 0 : index
    %c0_0 = arith.constant 0 : index
    %c0_1 = arith.constant 0 : index
    %0 = vector.load %arg1[%c0, %c0_0, %c0_1] : memref<1x4x256xf32, #tpu.memory_space<vmem>>, vector<1x4x256xf32>
    %1 = vector.shape_cast %0 : vector<1x4x256xf32> to vector<4x256xf32>
    %c0_2 = arith.constant 0 : index
    %c0_3 = arith.constant 0 : index
    %2 = vector.load %arg3[%c0_2, %c0_3] : memref<4x36xf32, #tpu.memory_space<vmem>>, vector<4x36xf32>
    %c17_i32 = arith.constant 17 : i32
    %3 = tpu.dynamic_rotate %1 by %c17_i32 dim 1 : vector<4x256xf32>, i32 -> vector<4x256xf32>
    %c0_4 = arith.constant 0 : index
    %c0_5 = arith.constant 0 : index
    %4 = vector.load %arg2[%c0_4, %c0_5] : memref<9x256xf32, #tpu.memory_space<vmem>>, vector<1x256xf32>
    %5 = vector.broadcast %4 : vector<1x256xf32> to vector<4x256xf32>
    %6 = arith.mulf %3, %5 : vector<4x256xf32>
    %c16_i32 = arith.constant 16 : i32
    %7 = tpu.dynamic_rotate %1 by %c16_i32 dim 1 : vector<4x256xf32>, i32 -> vector<4x256xf32>
    %c1 = arith.constant 1 : index
    %c0_6 = arith.constant 0 : index
    %8 = vector.load %arg2[%c1, %c0_6] : memref<9x256xf32, #tpu.memory_space<vmem>>, vector<1x256xf32>
    %9 = vector.broadcast %8 : vector<1x256xf32> to vector<4x256xf32>
    %10 = arith.mulf %7, %9 : vector<4x256xf32>
    %c15_i32 = arith.constant 15 : i32
    %11 = tpu.dynamic_rotate %1 by %c15_i32 dim 1 : vector<4x256xf32>, i32 -> vector<4x256xf32>
    %c2 = arith.constant 2 : index
    %c0_7 = arith.constant 0 : index
    %12 = vector.load %arg2[%c2, %c0_7] : memref<9x256xf32, #tpu.memory_space<vmem>>, vector<1x256xf32>
    %13 = vector.broadcast %12 : vector<1x256xf32> to vector<4x256xf32>
    %14 = arith.mulf %11, %13 : vector<4x256xf32>
    %c1_i32 = arith.constant 1 : i32
    %15 = tpu.dynamic_rotate %1 by %c1_i32 dim 1 : vector<4x256xf32>, i32 -> vector<4x256xf32>
    %c3 = arith.constant 3 : index
    %c0_8 = arith.constant 0 : index
    %16 = vector.load %arg2[%c3, %c0_8] : memref<9x256xf32, #tpu.memory_space<vmem>>, vector<1x256xf32>
    %17 = vector.broadcast %16 : vector<1x256xf32> to vector<4x256xf32>
    %18 = arith.mulf %15, %17 : vector<4x256xf32>
    %c255_i32 = arith.constant 255 : i32
    %19 = tpu.dynamic_rotate %1 by %c255_i32 dim 1 : vector<4x256xf32>, i32 -> vector<4x256xf32>
    %c5 = arith.constant 5 : index
    %c0_9 = arith.constant 0 : index
    %20 = vector.load %arg2[%c5, %c0_9] : memref<9x256xf32, #tpu.memory_space<vmem>>, vector<1x256xf32>
    %21 = vector.broadcast %20 : vector<1x256xf32> to vector<4x256xf32>
    %22 = arith.mulf %19, %21 : vector<4x256xf32>
    %c241_i32 = arith.constant 241 : i32
    %23 = tpu.dynamic_rotate %1 by %c241_i32 dim 1 : vector<4x256xf32>, i32 -> vector<4x256xf32>
    %c6 = arith.constant 6 : index
    %c0_10 = arith.constant 0 : index
    %24 = vector.load %arg2[%c6, %c0_10] : memref<9x256xf32, #tpu.memory_space<vmem>>, vector<1x256xf32>
    %25 = vector.broadcast %24 : vector<1x256xf32> to vector<4x256xf32>
    %26 = arith.mulf %23, %25 : vector<4x256xf32>
    %c240_i32 = arith.constant 240 : i32
    %27 = tpu.dynamic_rotate %1 by %c240_i32 dim 1 : vector<4x256xf32>, i32 -> vector<4x256xf32>
    %c7 = arith.constant 7 : index
    %c0_11 = arith.constant 0 : index
    %28 = vector.load %arg2[%c7, %c0_11] : memref<9x256xf32, #tpu.memory_space<vmem>>, vector<1x256xf32>
    %29 = vector.broadcast %28 : vector<1x256xf32> to vector<4x256xf32>
    %30 = arith.mulf %27, %29 : vector<4x256xf32>
    %c239_i32 = arith.constant 239 : i32
    %31 = tpu.dynamic_rotate %1 by %c239_i32 dim 1 : vector<4x256xf32>, i32 -> vector<4x256xf32>
    %c8 = arith.constant 8 : index
    %c0_12 = arith.constant 0 : index
    %32 = vector.load %arg2[%c8, %c0_12] : memref<9x256xf32, #tpu.memory_space<vmem>>, vector<1x256xf32>
    %33 = vector.broadcast %32 : vector<1x256xf32> to vector<4x256xf32>
    %34 = arith.mulf %31, %33 : vector<4x256xf32>
    %35 = tpu.concatenate %6, %10, %14, %18, %1, %22, %26, %30, %34 in 0 : vector<4x256xf32>, vector<4x256xf32>, vector<4x256xf32>, vector<4x256xf32>, vector<4x256xf32>, vector<4x256xf32>, vector<4x256xf32>, vector<4x256xf32>, vector<4x256xf32> -> vector<36x256xf32>
    %cst = arith.constant dense<0.000000e+00> : vector<4x256xf32>
    %36 = tpu.matmul %2, %35, %cst {dimension_numbers = #tpu.dot_dimension_numbers<[1], [0], [0], [1], [0, 0, 1, 1], [], []>} : vector<4x36xf32>, vector<36x256xf32>, vector<4x256xf32> -> vector<4x256xf32>
    %c0_13 = arith.constant 0 : index
    %c0_14 = arith.constant 0 : index
    %37 = vector.load %arg4[%c0_13, %c0_14] : memref<4x1xf32, #tpu.memory_space<vmem>>, vector<4x1xf32>
    %38 = vector.broadcast %37 : vector<4x1xf32> to vector<4x256xf32>
    %39 = arith.addf %36, %38 : vector<4x256xf32>
    %cst_15 = arith.constant 0.000000e+00 : f32
    %cst_16 = arith.constant 6.000000e+00 : f32
    %40 = vector.broadcast %cst_15 : f32 to vector<4x256xf32>
    %41 = arith.maximumf %40, %39 : vector<4x256xf32>
    %42 = vector.broadcast %cst_16 : f32 to vector<4x256xf32>
    %43 = arith.minimumf %42, %41 : vector<4x256xf32>
    %c0_17 = arith.constant 0 : index
    %c0_18 = arith.constant 0 : index
    %44 = vector.load %arg5[%c0_17, %c0_18] : memref<8x36xf32, #tpu.memory_space<vmem>>, vector<8x36xf32>
    %c17_i32_19 = arith.constant 17 : i32
    %45 = tpu.dynamic_rotate %43 by %c17_i32_19 dim 1 : vector<4x256xf32>, i32 -> vector<4x256xf32>
    %c0_20 = arith.constant 0 : index
    %c0_21 = arith.constant 0 : index
    %46 = vector.load %arg2[%c0_20, %c0_21] : memref<9x256xf32, #tpu.memory_space<vmem>>, vector<1x256xf32>
    %47 = vector.broadcast %46 : vector<1x256xf32> to vector<4x256xf32>
    %48 = arith.mulf %45, %47 : vector<4x256xf32>
    %c16_i32_22 = arith.constant 16 : i32
    %49 = tpu.dynamic_rotate %43 by %c16_i32_22 dim 1 : vector<4x256xf32>, i32 -> vector<4x256xf32>
    %c1_23 = arith.constant 1 : index
    %c0_24 = arith.constant 0 : index
    %50 = vector.load %arg2[%c1_23, %c0_24] : memref<9x256xf32, #tpu.memory_space<vmem>>, vector<1x256xf32>
    %51 = vector.broadcast %50 : vector<1x256xf32> to vector<4x256xf32>
    %52 = arith.mulf %49, %51 : vector<4x256xf32>
    %c15_i32_25 = arith.constant 15 : i32
    %53 = tpu.dynamic_rotate %43 by %c15_i32_25 dim 1 : vector<4x256xf32>, i32 -> vector<4x256xf32>
    %c2_26 = arith.constant 2 : index
    %c0_27 = arith.constant 0 : index
    %54 = vector.load %arg2[%c2_26, %c0_27] : memref<9x256xf32, #tpu.memory_space<vmem>>, vector<1x256xf32>
    %55 = vector.broadcast %54 : vector<1x256xf32> to vector<4x256xf32>
    %56 = arith.mulf %53, %55 : vector<4x256xf32>
    %c1_i32_28 = arith.constant 1 : i32
    %57 = tpu.dynamic_rotate %43 by %c1_i32_28 dim 1 : vector<4x256xf32>, i32 -> vector<4x256xf32>
    %c3_29 = arith.constant 3 : index
    %c0_30 = arith.constant 0 : index
    %58 = vector.load %arg2[%c3_29, %c0_30] : memref<9x256xf32, #tpu.memory_space<vmem>>, vector<1x256xf32>
    %59 = vector.broadcast %58 : vector<1x256xf32> to vector<4x256xf32>
    %60 = arith.mulf %57, %59 : vector<4x256xf32>
    %c255_i32_31 = arith.constant 255 : i32
    %61 = tpu.dynamic_rotate %43 by %c255_i32_31 dim 1 : vector<4x256xf32>, i32 -> vector<4x256xf32>
    %c5_32 = arith.constant 5 : index
    %c0_33 = arith.constant 0 : index
    %62 = vector.load %arg2[%c5_32, %c0_33] : memref<9x256xf32, #tpu.memory_space<vmem>>, vector<1x256xf32>
    %63 = vector.broadcast %62 : vector<1x256xf32> to vector<4x256xf32>
    %64 = arith.mulf %61, %63 : vector<4x256xf32>
    %c241_i32_34 = arith.constant 241 : i32
    %65 = tpu.dynamic_rotate %43 by %c241_i32_34 dim 1 : vector<4x256xf32>, i32 -> vector<4x256xf32>
    %c6_35 = arith.constant 6 : index
    %c0_36 = arith.constant 0 : index
    %66 = vector.load %arg2[%c6_35, %c0_36] : memref<9x256xf32, #tpu.memory_space<vmem>>, vector<1x256xf32>
    %67 = vector.broadcast %66 : vector<1x256xf32> to vector<4x256xf32>
    %68 = arith.mulf %65, %67 : vector<4x256xf32>
    %c240_i32_37 = arith.constant 240 : i32
    %69 = tpu.dynamic_rotate %43 by %c240_i32_37 dim 1 : vector<4x256xf32>, i32 -> vector<4x256xf32>
    %c7_38 = arith.constant 7 : index
    %c0_39 = arith.constant 0 : index
    %70 = vector.load %arg2[%c7_38, %c0_39] : memref<9x256xf32, #tpu.memory_space<vmem>>, vector<1x256xf32>
    %71 = vector.broadcast %70 : vector<1x256xf32> to vector<4x256xf32>
    %72 = arith.mulf %69, %71 : vector<4x256xf32>
    %c239_i32_40 = arith.constant 239 : i32
    %73 = tpu.dynamic_rotate %43 by %c239_i32_40 dim 1 : vector<4x256xf32>, i32 -> vector<4x256xf32>
    %c8_41 = arith.constant 8 : index
    %c0_42 = arith.constant 0 : index
    %74 = vector.load %arg2[%c8_41, %c0_42] : memref<9x256xf32, #tpu.memory_space<vmem>>, vector<1x256xf32>
    %75 = vector.broadcast %74 : vector<1x256xf32> to vector<4x256xf32>
    %76 = arith.mulf %73, %75 : vector<4x256xf32>
    %77 = tpu.concatenate %48, %52, %56, %60, %43, %64, %68, %72, %76 in 0 : vector<4x256xf32>, vector<4x256xf32>, vector<4x256xf32>, vector<4x256xf32>, vector<4x256xf32>, vector<4x256xf32>, vector<4x256xf32>, vector<4x256xf32>, vector<4x256xf32> -> vector<36x256xf32>
    %cst_43 = arith.constant dense<0.000000e+00> : vector<8x256xf32>
    %78 = tpu.matmul %44, %77, %cst_43 {dimension_numbers = #tpu.dot_dimension_numbers<[1], [0], [0], [1], [0, 0, 1, 1], [], []>} : vector<8x36xf32>, vector<36x256xf32>, vector<8x256xf32> -> vector<8x256xf32>
    %c0_44 = arith.constant 0 : index
    %c0_45 = arith.constant 0 : index
    %79 = vector.load %arg6[%c0_44, %c0_45] : memref<8x1xf32, #tpu.memory_space<vmem>>, vector<8x1xf32>
    %80 = vector.broadcast %79 : vector<8x1xf32> to vector<8x256xf32>
    %81 = arith.addf %78, %80 : vector<8x256xf32>
    %c0_46 = arith.constant 0 : index
    %c0_47 = arith.constant 0 : index
    %c0_48 = arith.constant 0 : index
    %82 = vector.load %arg7[%c0_46, %c0_47, %c0_48] : memref<1x8x256xf32, #tpu.memory_space<vmem>>, vector<1x8x256xf32>
    %83 = vector.shape_cast %82 : vector<1x8x256xf32> to vector<8x256xf32>
    %84 = vector.shape_cast %81 : vector<8x256xf32> to vector<1x8x256xf32>
    tpu.vector_store %arg7[%c0_46, %c0_47, %c0_48], %84 {strides = array<i32>} : memref<1x8x256xf32, #tpu.memory_space<vmem>>, vector<1x8x256xf32>,
    return
  }
  func.func @transform_0(%arg0: i32) -> (i32, i32, i32) {
    %c0_i32 = arith.constant 0 : i32
    %c0_i32_0 = arith.constant 0 : i32
    %c0_i32_1 = arith.constant 0 : i32
    return %arg0, %c0_i32, %c0_i32_0 : i32, i32, i32
  }
  func.func @transform_1(%arg0: i32) -> (i32, i32) {
    %c0_i32 = arith.constant 0 : i32
    %c0_i32_0 = arith.constant 0 : i32
    %c0_i32_1 = arith.constant 0 : i32
    return %c0_i32, %c0_i32_0 : i32, i32
  }
  func.func @transform_2(%arg0: i32) -> (i32, i32) {
    %c0_i32 = arith.constant 0 : i32
    %c0_i32_0 = arith.constant 0 : i32
    %c0_i32_1 = arith.constant 0 : i32
    return %c0_i32, %c0_i32_0 : i32, i32
  }
  func.func @transform_3(%arg0: i32) -> (i32, i32) {
    %c0_i32 = arith.constant 0 : i32
    %c0_i32_0 = arith.constant 0 : i32
    %c0_i32_1 = arith.constant 0 : i32
    return %c0_i32, %c0_i32_0 : i32, i32
  }
  func.func @transform_4(%arg0: i32) -> (i32, i32) {
    %c0_i32 = arith.constant 0 : i32
    %c0_i32_0 = arith.constant 0 : i32
    %c0_i32_1 = arith.constant 0 : i32
    return %c0_i32, %c0_i32_0 : i32, i32
  }
  func.func @transform_5(%arg0: i32) -> (i32, i32) {
    %c0_i32 = arith.constant 0 : i32
    %c0_i32_0 = arith.constant 0 : i32
    %c0_i32_1 = arith.constant 0 : i32
    return %c0_i32, %c0_i32_0 : i32, i32
  }
  func.func @transform_6(%arg0: i32) -> (i32, i32, i32) {
    %c0_i32 = arith.constant 0 : i32
    %c0_i32_0 = arith.constant 0 : i32
    %c0_i32_1 = arith.constant 0 : i32
    return %arg0, %c0_i32, %c0_i32_0 : i32, i32, i32
  }
}

</mosaic_0001>

<llo_original>
// kernel: tpu_custom_call.1
$region0: #{tpu_custom_call.1}
  #allocation0 [shape = 'u32[]', space=smem, size = 0x4, offset = 0x4, fixed_abs, tag = 'smem constant byte address 0x4 - core index']
  #allocation1 [shape = 'u32[144,128]{1,0:T(1,128)}', space=vmem, size = 0x12000, scoped, tag = 'internal scratch']
  %s0 = inlined_call_operand.hbm [shape: f32[2,4,256], index: 0, kind: input, shape index: {}]
  %s1 = inlined_call_operand.hbm [shape: f32[9,256], index: 1, kind: input, shape index: {}]
  %s2 = inlined_call_operand.vmem [shape: f32[4,36], index: 2, kind: input, shape index: {}]
  %s3 = inlined_call_operand.vmem [shape: f32[4,1], index: 3, kind: input, shape index: {}]
  %s4 = inlined_call_operand.vmem [shape: f32[8,36], index: 4, kind: input, shape index: {}]
  %s5 = inlined_call_operand.vmem [shape: f32[8,1], index: 5, kind: input, shape index: {}]
  %s6 = inlined_call_operand.hbm [shape: f32[2,8,256], index: 6, kind: output, shape index: {}]
  %s7 = sld [smem:[#allocation0]]
  $region65: #{tpu_custom_call.1} parent=0
    _
  %s9 = ssub.s32 1, %s7
  %s10 = scalar_select 0, %s9, %s7
  $region1: #{tpu_custom_call.1} parent=0
    #allocation2 [shape = 'u8[8192]{0}', space=vmem, size = 0x2000, scoped, tag = 'input window, operand 0']
    #allocation3 [shape = 's32[2]{0}', space=sflag, size = 0x8, scoped, tag = 'scoped memory for tpu_custom_call.1']
    #allocation4 [shape = 's32[2]{0}', space=sflag, size = 0x8, scoped, tag = 'scoped memory for tpu_custom_call.1']
    #allocation5 [shape = 'u8[16384]{0}', space=vmem, size = 0x4000, scoped, tag = 'input window, operand 1, single buffered']
    #allocation6 [shape = 's32[1]{0}', space=sflag, size = 0x4, scoped, tag = 'scoped memory for tpu_custom_call.1']
    #allocation7 [shape = 'u8[16384]{0}', space=vmem, size = 0x4000, scoped, tag = 'output window, operand 0']
    %11 = vsyncpa [#allocation3], 0
    %s12 = scalar_lea.sflag [#allocation3], 1
    %13 = vsyncpa %s12, 0
    %14 = vsyncpa [#allocation6], 0
    %15 = vsyncpa [#allocation4], 0
    %s16 = scalar_lea.sflag [#allocation4], 1
    %17 = vsyncpa %s16, 0
    loop: start=0, step=1, limit=4
    $region2: #{tpu_custom_call.1} parent=1 // loop_pre_header
      _
    $region3: #{tpu_custom_call.1} parent=1 // loop_header
      %s19 = sphi 0, %s23
      %p20 = scmp.ge.s32.totalorder %s19, 4
      %s29 = sphi 0, %s31
      %s32 = sphi 0, %s29
      %s33 = sphi 0, %s32
      %s49 = sphi 0, %s33
      %s53 = sphi 0, %s53
      %s55 = sphi 0, %s53
      %s56 = sphi 0, %s55
      %s70 = sphi 0, %s56
      %s74 = sphi 0, %s74
      %s76 = sphi 0, %s74
      %s77 = sphi 0, %s76
      %s91 = sphi 0, %s77
      %s95 = sphi 0, %s95
      %s97 = sphi 0, %s95
      %s98 = sphi 0, %s97
      %s112 = sphi 0, %s98
      %s116 = sphi 0, %s116
      %s118 = sphi 0, %s116
      %s119 = sphi 0, %s118
      %s133 = sphi 0, %s119
      %s137 = sphi 0, %s137
      %s139 = sphi 0, %s137
      %s140 = sphi 0, %s139
      %s154 = sphi 0, %s140
      %s160 = sphi 0, %s162
      %s163 = sphi 0, %s160
      %s164 = sphi 0, %s163
      %s180 = sphi 0, %s164
    $region4: #{tpu_custom_call.1} parent=1 // loop_header_branch
      %22 = sbr.rel (%p20) target = $region8
    $region5: #{tpu_custom_call.1} parent=1 // loop_body
      %s24 = ssub.s32 %s19, 1
      %s25 = ssub.s32 %s19, 2
      %s26 = sadd.s32 %s19, 1
      %s27 = ssub.s32 %s19, %s26
      %p28 = scmp.eq.s32.totalorder %s27, 0
      %s30 = sadd.s32 %s29, 1
      %s31 = scalar_select %p28, %s29, %s30
      %p34 = pneg %p28
      %p35 = scmp.eq.s32.totalorder %s19, 1
      %p36 = por %p34, %p35
      %p37 = scmp.ne.s32.totalorder %s29, %s32
      %p38 = scmp.eq.s32.totalorder %s19, 0
      %p39 = por %p37, %p38
      %p40 = scmp.ne.s32.totalorder %s29, %s32
      %p41 = scmp.eq.s32.totalorder %s24, 1
      %p42 = por %p40, %p41
      %p43 = scmp.ne.s32.totalorder %s32, %s33
      %p44 = scmp.eq.s32.totalorder %s24, 0
      %p45 = por %p43, %p44
      %p46 = scmp.ne.s32.totalorder %s32, %s33
      %p47 = scmp.eq.s32.totalorder %s25, 1
      %p48 = por %p46, %p47
      %p50 = scmp.ne.s32.totalorder %s33, %s49
      %p51 = scmp.eq.s32.totalorder %s25, 0
      %p52 = por %p50, %p51
      %s54 = sadd.s32 %s53, 1
      %p57 = scmp.eq.s32.totalorder %s19, 1
      %p58 = scmp.ne.s32.totalorder %s53, %s55
      %p59 = scmp.eq.s32.totalorder %s19, 0
      %p60 = por %p58, %p59
      %p61 = scmp.ne.s32.totalorder %s53, %s55
      %p62 = scmp.eq.s32.totalorder %s24, 1
      %p63 = por %p61, %p62
      %p64 = scmp.ne.s32.totalorder %s55, %s56
      %p65 = scmp.eq.s32.totalorder %s24, 0
      %p66 = por %p64, %p65
      %p67 = scmp.ne.s32.totalorder %s55, %s56
      %p68 = scmp.eq.s32.totalorder %s25, 1
      %p69 = por %p67, %p68
      %p71 = scmp.ne.s32.totalorder %s56, %s70
      %p72 = scmp.eq.s32.totalorder %s25, 0
      %p73 = por %p71, %p72
      %s75 = sadd.s32 %s74, 1
      %p78 = scmp.eq.s32.totalorder %s19, 1
      %p79 = scmp.ne.s32.totalorder %s74, %s76
      %p80 = scmp.eq.s32.totalorder %s19, 0
      %p81 = por %p79, %p80
      %p82 = scmp.ne.s32.totalorder %s74, %s76
      %p83 = scmp.eq.s32.totalorder %s24, 1
      %p84 = por %p82, %p83
      %p85 = scmp.ne.s32.totalorder %s76, %s77
      %p86 = scmp.eq.s32.totalorder %s24, 0
      %p87 = por %p85, %p86
      %p88 = scmp.ne.s32.totalorder %s76, %s77
      %p89 = scmp.eq.s32.totalorder %s25, 1
      %p90 = por %p88, %p89
      %p92 = scmp.ne.s32.totalorder %s77, %s91
      %p93 = scmp.eq.s32.totalorder %s25, 0
      %p94 = por %p92, %p93
      %s96 = sadd.s32 %s95, 1
      %p99 = scmp.eq.s32.totalorder %s19, 1
      %p100 = scmp.ne.s32.totalorder %s95, %s97
      %p101 = scmp.eq.s32.totalorder %s19, 0
      %p102 = por %p100, %p101
      %p103 = scmp.ne.s32.totalorder %s95, %s97
      %p104 = scmp.eq.s32.totalorder %s24, 1
      %p105 = por %p103, %p104
      %p106 = scmp.ne.s32.totalorder %s97, %s98
      %p107 = scmp.eq.s32.totalorder %s24, 0
      %p108 = por %p106, %p107
      %p109 = scmp.ne.s32.totalorder %s97, %s98
      %p110 = scmp.eq.s32.totalorder %s25, 1
      %p111 = por %p109, %p110
      %p113 = scmp.ne.s32.totalorder %s98, %s112
      %p114 = scmp.eq.s32.totalorder %s25, 0
      %p115 = por %p113, %p114
      %s117 = sadd.s32 %s116, 1
      %p120 = scmp.eq.s32.totalorder %s19, 1
      %p121 = scmp.ne.s32.totalorder %s116, %s118
      %p122 = scmp.eq.s32.totalorder %s19, 0
      %p123 = por %p121, %p122
      %p124 = scmp.ne.s32.totalorder %s116, %s118
      %p125 = scmp.eq.s32.totalorder %s24, 1
      %p126 = por %p124, %p125
      %p127 = scmp.ne.s32.totalorder %s118, %s119
      %p128 = scmp.eq.s32.totalorder %s24, 0
      %p129 = por %p127, %p128
      %p130 = scmp.ne.s32.totalorder %s118, %s119
      %p131 = scmp.eq.s32.totalorder %s25, 1
      %p132 = por %p130, %p131
      %p134 = scmp.ne.s32.totalorder %s119, %s133
      %p135 = scmp.eq.s32.totalorder %s25, 0
      %p136 = por %p134, %p135
      %s138 = sadd.s32 %s137, 1
      %p141 = scmp.eq.s32.totalorder %s19, 1
      %p142 = scmp.ne.s32.totalorder %s137, %s139
      %p143 = scmp.eq.s32.totalorder %s19, 0
      %p144 = por %p142, %p143
      %p145 = scmp.ne.s32.totalorder %s137, %s139
      %p146 = scmp.eq.s32.totalorder %s24, 1
      %p147 = por %p145, %p146
      %p148 = scmp.ne.s32.totalorder %s139, %s140
      %p149 = scmp.eq.s32.totalorder %s24, 0
      %p150 = por %p148, %p149
      %p151 = scmp.ne.s32.totalorder %s139, %s140
      %p152 = scmp.eq.s32.totalorder %s25, 1
      %p153 = por %p151, %p152
      %p155 = scmp.ne.s32.totalorder %s140, %s154
      %p156 = scmp.eq.s32.totalorder %s25, 0
      %p157 = por %p155, %p156
      %s158 = ssub.s32 %s19, %s26
      %p159 = scmp.eq.s32.totalorder %s158, 0
      %s161 = sadd.s32 %s160, 1
      %s162 = scalar_select %p159, %s160, %s161
      %p165 = pneg %p159
      %p166 = scmp.eq.s32.totalorder %s19, 1
      %p167 = por %p165, %p166
      %p168 = scmp.ne.s32.totalorder %s160, %s163
      %p169 = scmp.eq.s32.totalorder %s19, 0
      %p170 = por %p168, %p169
      %p171 = scmp.ne.s32.totalorder %s160, %s163
      %p172 = scmp.eq.s32.totalorder %s24, 1
      %p173 = por %p171, %p172
      %p174 = scmp.ne.s32.totalorder %s163, %s164
      %p175 = scmp.eq.s32.totalorder %s24, 0
      %p176 = por %p174, %p175
      %p177 = scmp.ne.s32.totalorder %s163, %s164
      %p178 = scmp.eq.s32.totalorder %s25, 1
      %p179 = por %p177, %p178
      %p181 = scmp.ne.s32.totalorder %s164, %s180
      %p182 = scmp.eq.s32.totalorder %s25, 0
      %p183 = por %p181, %p182
      %p184 = scmp.le.s32.totalorder 1, %s19
      %p185 = scmp.lt.s32.totalorder %s19, 3
      %p186 = pnand %p184, %p185
      %p187 = pneg %p186
      // Predicated region
      $region9: #{tpu_custom_call.1} parent=5 // pred_check
        _
      $region10: #{tpu_custom_call.1} parent=5 // pred_check_branch
        %189 = sbr.rel (%p186) target = $region12
      $region11: #{tpu_custom_call.1} parent=5 // pred_region
        %s190 = ssub.s32 %s19, 1
        // Predicated region
        $region13: #{tpu_custom_call.1} parent=11 // pred_check
          %p191 = pneg %p66
        $region14: #{tpu_custom_call.1} parent=11 // pred_check_branch
          %193 = sbr.rel (%p191) target = $region16
        $region15: #{tpu_custom_call.1} parent=11 // pred_region
          %s195 = ssub.s32 512, 512
          %196 = vsyncadd [#allocation6], %s195
          %s197 = sshll.u32 [#allocation5], 4
          %s198 = int_to_ptr.vmem [resolvable:$true] %s197
          %203 = dma.hbm_to_vmem [thread:$0]  %s1, 512, %s198, [#allocation6], 256, 256, 16
        $region16: #{tpu_custom_call.1} parent=11 // pred_fallthru
          _
        // Predicated region
        $region17: #{tpu_custom_call.1} parent=11 // pred_check
          %p204 = pneg %p87
        $region18: #{tpu_custom_call.1} parent=11 // pred_check_branch
          %206 = sbr.rel (%p204) target = $region20
        $region19: #{tpu_custom_call.1} parent=11 // pred_region
          _
        $region20: #{tpu_custom_call.1} parent=11 // pred_fallthru
          _
        // Predicated region
        $region21: #{tpu_custom_call.1} parent=11 // pred_check
          %p207 = pneg %p108
        $region22: #{tpu_custom_call.1} parent=11 // pred_check_branch
          %209 = sbr.rel (%p207) target = $region24
        $region23: #{tpu_custom_call.1} parent=11 // pred_region
          _
        $region24: #{tpu_custom_call.1} parent=11 // pred_fallthru
          _
        // Predicated region
        $region25: #{tpu_custom_call.1} parent=11 // pred_check
          %p210 = pneg %p129
        $region26: #{tpu_custom_call.1} parent=11 // pred_check_branch
          %212 = sbr.rel (%p210) target = $region28
        $region27: #{tpu_custom_call.1} parent=11 // pred_region
          _
        $region28: #{tpu_custom_call.1} parent=11 // pred_fallthru
          _
        // Predicated region
        $region29: #{tpu_custom_call.1} parent=11 // pred_check
          %p213 = pneg %p150
        $region30: #{tpu_custom_call.1} parent=11 // pred_check_branch
          %215 = sbr.rel (%p213) target = $region32
        $region31: #{tpu_custom_call.1} parent=11 // pred_region
          _
        $region32: #{tpu_custom_call.1} parent=11 // pred_fallthru
          _
      $region12: #{tpu_custom_call.1} parent=5 // pred_fallthru
        _
      %p216 = scmp.lt.s32.totalorder %s19, 2
      // Predicated region
      $region33: #{tpu_custom_call.1} parent=5 // pred_check
        %p217 = pneg %p216
      $region34: #{tpu_custom_call.1} parent=5 // pred_check_branch
        %219 = sbr.rel (%p217) target = $region36
      $region35: #{tpu_custom_call.1} parent=5 // pred_region
        // Predicated region
        $region37: #{tpu_custom_call.1} parent=35 // pred_check
          %p220 = pneg %p39
        $region38: #{tpu_custom_call.1} parent=35 // pred_check_branch
          %222 = sbr.rel (%p220) target = $region40
        $region39: #{tpu_custom_call.1} parent=35 // pred_region
          %s223 = sand.u32 %s29, 1
          %s224 = scalar_lea.sflag [#allocation3], %s223
          %s225 = sand.u32 %s29, 1
          %s226 = smul.addr %s225, 8
          %s227 = scalar_lea.vmem [#allocation2], %s226
          %s229 = ssub.s32 128, 128
          %230 = vsyncadd %s224, %s229
          %s231 = smul.addr %s19, 2
          %s232 = smul.addr %s231, 64
          %s233 = scalar_lea.hbm %s0, %s232
          %s235 = sshll.u32 %s227, 4
          %s236 = int_to_ptr.vmem [resolvable:$true] %s235
          %238 = dma.hbm_to_vmem [thread:$0]  %s233, 128, %s236, %s224
        $region40: #{tpu_custom_call.1} parent=35 // pred_fallthru
          _
      $region36: #{tpu_custom_call.1} parent=5 // pred_fallthru
        _
      %p239 = scmp.le.s32.totalorder 1, %s19
      %p240 = scmp.lt.s32.totalorder %s19, 3
      %p241 = pnand %p239, %p240
      %p242 = pneg %p241
      // Predicated region
      $region41: #{tpu_custom_call.1} parent=5 // pred_check
        _
      $region42: #{tpu_custom_call.1} parent=5 // pred_check_branch
        %244 = sbr.rel (%p241) target = $region44
      $region43: #{tpu_custom_call.1} parent=5 // pred_region
        %s245 = ssub.s32 %s19, 1
        %s246 = sand.u32 %s32, 1
        %s247 = scalar_lea.sflag [#allocation3], %s246
        %s248 = sand.u32 %s32, 1
        %s249 = smul.addr %s248, 8
        %s250 = scalar_lea.vmem [#allocation2], %s249
        // Predicated region
        $region45: #{tpu_custom_call.1} parent=43 // pred_check
          %p251 = pneg %p45
        $region46: #{tpu_custom_call.1} parent=43 // pred_check_branch
          %253 = sbr.rel (%p251) target = $region48
        $region47: #{tpu_custom_call.1} parent=43 // pred_region
          %254 = dma.done %s247, 128
        $region48: #{tpu_custom_call.1} parent=43 // pred_fallthru
          _
        // Predicated region
        $region49: #{tpu_custom_call.1} parent=43 // pred_check
          %p255 = pneg %p66
        $region50: #{tpu_custom_call.1} parent=43 // pred_check_branch
          %257 = sbr.rel (%p255) target = $region52
        $region51: #{tpu_custom_call.1} parent=43 // pred_region
          %258 = dma.done [#allocation6], 512
        $region52: #{tpu_custom_call.1} parent=43 // pred_fallthru
          _
        %s259 = sand.u32 %s32, 1
        %s260 = scalar_lea.sflag [#allocation3], %s259
        %s261 = sand.u32 %s32, 1
        %s262 = smul.addr %s261, 8
        %s263 = scalar_lea.vmem [#allocation2], %s262
        %p264 = pneg %p45
        %p265 = pneg %p42
        %p266 = pneg %p66
        %p267 = pneg %p63
        %p268 = pneg %p87
        %p269 = pneg %p84
        %p270 = pneg %p108
        %p271 = pneg %p105
        %p272 = pneg %p129
        %p273 = pneg %p126
        %p274 = pneg %p150
        %p275 = pneg %p147
        %p276 = pneg %p176
        %p277 = pneg %p173
        %s278 = sand.u32 %s163, 1
        %s279 = scalar_lea.sflag [#allocation4], %s278
        %s280 = sand.u32 %s163, 1
        %s281 = smul.addr %s280, 16
        %s282 = scalar_lea.vmem [#allocation7], %s281
        %v283 = vld [vmem:[%s250] sm:$0xff]
        %v284 = vld [vmem:[%s2] sm:$0xf]
        %v286 = vcombine.high %v283, %v283
        %288 = vrot.lane.b32.xlu0 %v283, 17
        %v289 = vpop.permute.xlu0 %288
        %290 = vrot.lane.b32.xlu0 %v286, 17
        %v291 = vpop.permute.xlu0 %290
        %v292 = vlaneseq
        %v293 = vand.u32 %v292, 127
        %vm294 = vcmp.lt.s32.totalorder %v293, 17
        %v295 = vsel %vm294, %v289, %v291
        %v296 = vsel %vm294, %v291, %v289
        %v297 = vld [vmem:[#allocation5] ss:$8 sm:$0x3]
        %v299 = vlaneseq
        %v300 = vshrl.u32 %v299, 7
        %v301 = vsub.s32 0, %v300
        %v302 = vrot.slane %v297, %v301
        %v303 = vlaneseq
        %v304 = vshrl.u32 %v303, 7
        %v305 = vsub.s32 1, %v304
        %v306 = vrot.slane %v297, %v305
        %v309 = vmul.f32 %v296, %v302
        %v310 = vmul.f32 %v295, %v306
        %311 = vrot.lane.b32.xlu0 %v283, 16
        %v312 = vpop.permute.xlu0 %311
        %313 = vrot.lane.b32.xlu0 %v286, 16
        %v314 = vpop.permute.xlu0 %313
        %vm315 = vcmp.lt.s32.totalorder %v293, 16
        %v316 = vsel %vm315, %v312, %v314
        %v317 = vsel %vm315, %v314, %v312
        %s318 = scalar_lea.vmem [#allocation5], 1
        %v319 = vld [vmem:[%s318] ss:$8 sm:$0x3]
        %v321 = vlaneseq
        %v322 = vshrl.u32 %v321, 7
        %v323 = vsub.s32 0, %v322
        %v324 = vrot.slane %v319, %v323
        %v325 = vlaneseq
        %v326 = vshrl.u32 %v325, 7
        %v327 = vsub.s32 1, %v326
        %v328 = vrot.slane %v319, %v327
        %v331 = vmul.f32 %v317, %v324
        %v332 = vmul.f32 %v316, %v328
        %333 = vrot.lane.b32.xlu0 %v283, 15
        %v334 = vpop.permute.xlu0 %333
        %335 = vrot.lane.b32.xlu0 %v286, 15
        %v336 = vpop.permute.xlu0 %335
        %vm337 = vcmp.lt.s32.totalorder %v293, 15
        %v338 = vsel %vm337, %v334, %v336
        %v339 = vsel %vm337, %v336, %v334
        %s340 = scalar_lea.vmem [#allocation5], 2
        %v341 = vld [vmem:[%s340] ss:$8 sm:$0x3]
        %v343 = vlaneseq
        %v344 = vshrl.u32 %v343, 7
        %v345 = vsub.s32 0, %v344
        %v346 = vrot.slane %v341, %v345
        %v347 = vlaneseq
        %v348 = vshrl.u32 %v347, 7
        %v349 = vsub.s32 1, %v348
        %v350 = vrot.slane %v341, %v349
        %v353 = vmul.f32 %v339, %v346
        %v354 = vmul.f32 %v338, %v350
        %355 = vrot.lane.b32.xlu0 %v283, 1
        %v356 = vpop.permute.xlu0 %355
        %357 = vrot.lane.b32.xlu0 %v286, 1
        %v358 = vpop.permute.xlu0 %357
        %vm359 = vcmp.lt.s32.totalorder %v293, 1
        %v360 = vsel %vm359, %v356, %v358
        %v361 = vsel %vm359, %v358, %v356
        %s362 = scalar_lea.vmem [#allocation5], 3
        %v363 = vld [vmem:[%s362] ss:$8 sm:$0x3]
        %v365 = vlaneseq
        %v366 = vshrl.u32 %v365, 7
        %v367 = vsub.s32 0, %v366
        %v368 = vrot.slane %v363, %v367
        %v369 = vlaneseq
        %v370 = vshrl.u32 %v369, 7
        %v371 = vsub.s32 1, %v370
        %v372 = vrot.slane %v363, %v371
        %v375 = vmul.f32 %v361, %v368
        %v376 = vmul.f32 %v360, %v372
        %377 = vrot.lane.b32.xlu0 %v283, 127
        %v378 = vpop.permute.xlu0 %377
        %379 = vrot.lane.b32.xlu0 %v286, 127
        %v380 = vpop.permute.xlu0 %379
        %vm381 = vcmp.lt.s32.totalorder %v293, 127
        %v382 = vsel %vm381, %v378, %v380
        %v383 = vsel %vm381, %v380, %v378
        %s384 = scalar_lea.vmem [#allocation5], 5
        %v385 = vld [vmem:[%s384] ss:$8 sm:$0x3]
        %v387 = vlaneseq
        %v388 = vshrl.u32 %v387, 7
        %v389 = vsub.s32 0, %v388
        %v390 = vrot.slane %v385, %v389
        %v391 = vlaneseq
        %v392 = vshrl.u32 %v391, 7
        %v393 = vsub.s32 1, %v392
        %v394 = vrot.slane %v385, %v393
        %v397 = vmul.f32 %v382, %v390
        %v398 = vmul.f32 %v383, %v394
        %399 = vrot.lane.b32.xlu0 %v283, 113
        %v400 = vpop.permute.xlu0 %399
        %401 = vrot.lane.b32.xlu0 %v286, 113
        %v402 = vpop.permute.xlu0 %401
        %vm403 = vcmp.lt.s32.totalorder %v293, 113
        %v404 = vsel %vm403, %v400, %v402
        %v405 = vsel %vm403, %v402, %v400
        %s406 = scalar_lea.vmem [#allocation5], 6
        %v407 = vld [vmem:[%s406] ss:$8 sm:$0x3]
        %v409 = vlaneseq
        %v410 = vshrl.u32 %v409, 7
        %v411 = vsub.s32 0, %v410
        %v412 = vrot.slane %v407, %v411
        %v413 = vlaneseq
        %v414 = vshrl.u32 %v413, 7
        %v415 = vsub.s32 1, %v414
        %v416 = vrot.slane %v407, %v415
        %v419 = vmul.f32 %v404, %v412
        %v420 = vmul.f32 %v405, %v416
        %421 = vrot.lane.b32.xlu0 %v283, 112
        %v422 = vpop.permute.xlu0 %421
        %423 = vrot.lane.b32.xlu0 %v286, 112
        %v424 = vpop.permute.xlu0 %423
        %vm425 = vcmp.lt.s32.totalorder %v293, 112
        %v426 = vsel %vm425, %v422, %v424
        %v427 = vsel %vm425, %v424, %v422
        %s428 = scalar_lea.vmem [#allocation5], 7
        %v429 = vld [vmem:[%s428] ss:$8 sm:$0x3]
        %v431 = vlaneseq
        %v432 = vshrl.u32 %v431, 7
        %v433 = vsub.s32 0, %v432
        %v434 = vrot.slane %v429, %v433
        %v435 = vlaneseq
        %v436 = vshrl.u32 %v435, 7
        %v437 = vsub.s32 1, %v436
        %v438 = vrot.slane %v429, %v437
        %v441 = vmul.f32 %v426, %v434
        %v442 = vmul.f32 %v427, %v438
        %443 = vrot.lane.b32.xlu0 %v283, 111
        %v444 = vpop.permute.xlu0 %443
        %445 = vrot.lane.b32.xlu0 %v286, 111
        %v446 = vpop.permute.xlu0 %445
        %vm447 = vcmp.lt.s32.totalorder %v293, 111
        %v448 = vsel %vm447, %v444, %v446
        %v449 = vsel %vm447, %v446, %v444
        %s450 = scalar_lea.vmem [#allocation5], 16
        %v451 = vld [vmem:[%s450] ss:$8 sm:$0x3]
        %v453 = vlaneseq
        %v454 = vshrl.u32 %v453, 7
        %v455 = vsub.s32 0, %v454
        %v456 = vrot.slane %v451, %v455
        %v457 = vlaneseq
        %v458 = vshrl.u32 %v457, 7
        %v459 = vsub.s32 1, %v458
        %v460 = vrot.slane %v451, %v459
        %v463 = vmul.f32 %v448, %v456
        %v464 = vmul.f32 %v449, %v460
        %v467 = vrot.slane %v331, 4
        %v468 = vrot.slane %v332, 4
        %v473 = vrot.slane %v375, 4
        %v474 = vrot.slane %v376, 4
        %v479 = vrot.slane %v397, 4
        %v480 = vrot.slane %v398, 4
        %v485 = vrot.slane %v441, 4
        %v486 = vrot.slane %v442, 4
        %vm489 = vcmask 1043456
        %v490 = vsel %vm489, %v309, %v467
        %v491 = vsel %vm489, %v310, %v468
        %v492 = vsel %vm489, %v353, %v473
        %v493 = vsel %vm489, %v354, %v474
        %v494 = vsel %vm489, %v283, %v479
        %v495 = vsel %vm489, %v286, %v480
        %v496 = vsel %vm489, %v419, %v485
        %v497 = vsel %vm489, %v420, %v486
        %v498 = vld [vmem:[%s3] sm:$0xf]
        %500 = vset.pattern.permute.xlu0 0
        %501 = vperm.xlu0 %500, %v498
        %v502 = vpop.permute.xlu0 %501
        %vm504 = vcmask 293888
        %v506 = vsel %vm504, %v284, 0
        %v509 = vsel %vm489, %v463, 0
        %v512 = vsel %vm489, %v464, 0
        %514 = vmatprep.subr.mxu0 %v491
        %515 = vmatpush1.msra.mxu0 %v490
        %516 = vmatprep.subr.mxu0 %v493
        %517 = vmatpush1.msra.mxu0 %v492
        %518 = vmatprep.subr.mxu0 %v495
        %519 = vmatpush1.msra.mxu0 %v494
        %520 = vmatprep.subr.mxu0 %v497
        %521 = vmatpush1.msra.mxu0 %v496
        %522 = vmatprep.subr.mxu0 %v512
        %523 = vmatpush1.msra.mxu0 %v509
        %524 = vmatprep.subr.mxu0 0.0
        %525 = vmatpush1.msra.mxu0 0.0
        %526 = vmatprep.subr.mxu0 0.0
        %527 = vmatpush1.msra.mxu0 0.0
        %528 = vmatprep.subr.mxu0 0.0
        %529 = vmatpush1.msra.mxu0 0.0
        %530 = vmatprep.subr.mxu0 0.0
        %531 = vmatpush1.msra.mxu0 0.0
        %532 = vmatprep.subr.mxu0 0.0
        %533 = vmatpush1.msra.mxu0 0.0
        %534 = vmatprep.subr.mxu0 0.0
        %535 = vmatpush1.msra.mxu0 0.0
        %536 = vmatprep.subr.mxu0 0.0
        %537 = vmatpush1.msra.mxu0 0.0
        %538 = vmatprep.subr.mxu0 0.0
        %539 = vmatpush1.msra.mxu0 0.0
        %540 = vmatprep.subr.mxu0 0.0
        %541 = vmatpush1.msra.mxu0 0.0
        %542 = vmatprep.subr.mxu0 0.0
        %543 = vmatpush1.msra.mxu0 0.0
        %544 = vmatprep.subr.mxu0 0.0
        %545 = vmatpush1.msra.mxu0 0.0
        %546 = vmatprep.subr.mxu0 0.0
        %547 = vmatpush1.msra.mxu0 0.0
        %548 = vmatprep.subr.mxu0 0.0
        %549 = vmatpush1.msra.mxu0 0.0
        %550 = vmatprep.subr.mxu0 0.0
        %551 = vmatpush1.msra.mxu0 0.0
        %552 = vmatprep.subr.mxu0 0.0
        %553 = vmatpush1.msra.mxu0 0.0
        %554 = vmatprep.subr.mxu0 0.0
        %555 = vmatpush1.msra.mxu0 0.0
        %556 = vmatprep.subr.mxu0 0.0
        %557 = vmatpush1.msra.mxu0 0.0
        %558 = vmatprep.subr.mxu0 0.0
        %559 = vmatpush1.msra.mxu0 0.0
        %560 = vmatprep.subr.mxu0 0.0
        %561 = vmatpush1.msra.mxu0 0.0
        %562 = vmatprep.subr.mxu0 0.0
        %563 = vmatpush1.msra.mxu0 0.0
        %564 = vmatprep.subr.mxu0 0.0
        %565 = vmatpush1.msra.mxu0 0.0
        %566 = vmatprep.subr.mxu0 0.0
        %567 = vmatpush1.msra.mxu0 0.0
        %568 = vmatprep.subr.mxu0 0.0
        %569 = vmatpush1.msra.mxu0 0.0
        %570 = vmatprep.subr.mxu0 0.0
        %571 = vmatpush1.msra.mxu0 0.0
        %572 = vmatprep.subr.mxu0 0.0
        %573 = vmatpush1.msra.mxu0 0.0
        %574 = vmatprep.subr.mxu0 0.0
        %575 = vmatpush1.msra.mxu0 0.0
        %576 = vmatprep.subr.mxu0 0.0
        %577 = vmatpush1.msra.mxu0 0.0
        %578 = vmatprep.mubr.f32.mxu0 0.0
        %579 = vmatmul.mubr.f32.gmra.mrb[0].mxu0 %v506
        %v580 = vpop.f32.mrb[0].mxu0
        %v581 = vadd.f32 %v502, %v580
        %v582 = vpop.f32.mrb[0].mxu0
        %v583 = vadd.f32 %v502, %v582
        %584 = vdwg.mxu0
        %v585 = vmax.f32 %v581, 0.0
        %v586 = vmax.f32 %v583, 0.0
        %v587 = vmin.f32 %v585, 6.0
        %v588 = vmin.f32 %v586, 6.0
        %v589 = vld [vmem:[%s4] sm:$0xff]
        %590 = vrot.lane.b32.xlu0 %v587, 17
        %v591 = vpop.permute.xlu0 %590
        %592 = vrot.lane.b32.xlu0 %v588, 17
        %v593 = vpop.permute.xlu0 %592
        %v594 = vsel %vm294, %v591, %v593
        %v595 = vsel %vm294, %v593, %v591
        %v596 = vmul.f32 %v595, %v302
        %v597 = vmul.f32 %v594, %v306
        %598 = vrot.lane.b32.xlu0 %v587, 16
        %v599 = vpop.permute.xlu0 %598
        %600 = vrot.lane.b32.xlu0 %v588, 16
        %v601 = vpop.permute.xlu0 %600
        %v602 = vsel %vm315, %v599, %v601
        %v603 = vsel %vm315, %v601, %v599
        %v604 = vmul.f32 %v603, %v324
        %v605 = vmul.f32 %v602, %v328
        %606 = vrot.lane.b32.xlu0 %v587, 15
        %v607 = vpop.permute.xlu0 %606
        %608 = vrot.lane.b32.xlu0 %v588, 15
        %v609 = vpop.permute.xlu0 %608
        %v610 = vsel %vm337, %v607, %v609
        %v611 = vsel %vm337, %v609, %v607
        %v612 = vmul.f32 %v611, %v346
        %v613 = vmul.f32 %v610, %v350
        %614 = vrot.lane.b32.xlu0 %v587, 1
        %v615 = vpop.permute.xlu0 %614
        %616 = vrot.lane.b32.xlu0 %v588, 1
        %v617 = vpop.permute.xlu0 %616
        %v618 = vsel %vm359, %v615, %v617
        %v619 = vsel %vm359, %v617, %v615
        %v620 = vmul.f32 %v619, %v368
        %v621 = vmul.f32 %v618, %v372
        %622 = vrot.lane.b32.xlu0 %v587, 127
        %v623 = vpop.permute.xlu0 %622
        %624 = vrot.lane.b32.xlu0 %v588, 127
        %v625 = vpop.permute.xlu0 %624
        %v626 = vsel %vm381, %v623, %v625
        %v627 = vsel %vm381, %v625, %v623
        %v628 = vmul.f32 %v626, %v390
        %v629 = vmul.f32 %v627, %v394
        %630 = vrot.lane.b32.xlu0 %v587, 113
        %v631 = vpop.permute.xlu0 %630
        %632 = vrot.lane.b32.xlu0 %v588, 113
        %v633 = vpop.permute.xlu0 %632
        %v634 = vsel %vm403, %v631, %v633
        %v635 = vsel %vm403, %v633, %v631
        %v636 = vmul.f32 %v634, %v412
        %v637 = vmul.f32 %v635, %v416
        %638 = vrot.lane.b32.xlu0 %v587, 112
        %v639 = vpop.permute.xlu0 %638
        %640 = vrot.lane.b32.xlu0 %v588, 112
        %v641 = vpop.permute.xlu0 %640
        %v642 = vsel %vm425, %v639, %v641
        %v643 = vsel %vm425, %v641, %v639
        %v644 = vmul.f32 %v642, %v434
        %v645 = vmul.f32 %v643, %v438
        %646 = vrot.lane.b32.xlu0 %v587, 111
        %v647 = vpop.permute.xlu0 %646
        %648 = vrot.lane.b32.xlu0 %v588, 111
        %v649 = vpop.permute.xlu0 %648
        %v650 = vsel %vm447, %v647, %v649
        %v651 = vsel %vm447, %v649, %v647
        %v652 = vmul.f32 %v650, %v456
        %v653 = vmul.f32 %v651, %v460
        %v656 = vrot.slane %v604, 4
        %v657 = vrot.slane %v605, 4
        %v662 = vrot.slane %v620, 4
        %v663 = vrot.slane %v621, 4
        %v668 = vrot.slane %v628, 4
        %v669 = vrot.slane %v629, 4
        %v674 = vrot.slane %v644, 4
        %v675 = vrot.slane %v645, 4
        %v678 = vsel %vm489, %v596, %v656
        %v679 = vsel %vm489, %v597, %v657
        %v680 = vsel %vm489, %v612, %v662
        %v681 = vsel %vm489, %v613, %v663
        %v682 = vsel %vm489, %v587, %v668
        %v683 = vsel %vm489, %v588, %v669
        %v684 = vsel %vm489, %v636, %v674
        %v685 = vsel %vm489, %v637, %v675
        %v686 = vld [vmem:[%s5] sm:$0xff]
        %688 = vset.pattern.permute.xlu0 0
        %689 = vperm.xlu0 %688, %v686
        %v690 = vpop.permute.xlu0 %689
        %v693 = vsel %vm504, %v589, 0
        %v696 = vsel %vm489, %v652, 0
        %v699 = vsel %vm489, %v653, 0
        %701 = vmatprep.subr.mxu0 %v679
        %702 = vmatpush1.msra.mxu0 %v678
        %703 = vmatprep.subr.mxu0 %v681
        %704 = vmatpush1.msra.mxu0 %v680
        %705 = vmatprep.subr.mxu0 %v683
        %706 = vmatpush1.msra.mxu0 %v682
        %707 = vmatprep.subr.mxu0 %v685
        %708 = vmatpush1.msra.mxu0 %v684
        %709 = vmatprep.subr.mxu0 %v699
        %710 = vmatpush1.msra.mxu0 %v696
        %711 = vmatprep.subr.mxu0 0.0
        %712 = vmatpush1.msra.mxu0 0.0
        %713 = vmatprep.subr.mxu0 0.0
        %714 = vmatpush1.msra.mxu0 0.0
        %715 = vmatprep.subr.mxu0 0.0
        %716 = vmatpush1.msra.mxu0 0.0
        %717 = vmatprep.subr.mxu0 0.0
        %718 = vmatpush1.msra.mxu0 0.0
        %719 = vmatprep.subr.mxu0 0.0
        %720 = vmatpush1.msra.mxu0 0.0
        %721 = vmatprep.subr.mxu0 0.0
        %722 = vmatpush1.msra.mxu0 0.0
        %723 = vmatprep.subr.mxu0 0.0
        %724 = vmatpush1.msra.mxu0 0.0
        %725 = vmatprep.subr.mxu0 0.0
        %726 = vmatpush1.msra.mxu0 0.0
        %727 = vmatprep.subr.mxu0 0.0
        %728 = vmatpush1.msra.mxu0 0.0
        %729 = vmatprep.subr.mxu0 0.0
        %730 = vmatpush1.msra.mxu0 0.0
        %731 = vmatprep.subr.mxu0 0.0
        %732 = vmatpush1.msra.mxu0 0.0
        %733 = vmatprep.subr.mxu0 0.0
        %734 = vmatpush1.msra.mxu0 0.0
        %735 = vmatprep.subr.mxu0 0.0
        %736 = vmatpush1.msra.mxu0 0.0
        %737 = vmatprep.subr.mxu0 0.0
        %738 = vmatpush1.msra.mxu0 0.0
        %739 = vmatprep.subr.mxu0 0.0
        %740 = vmatpush1.msra.mxu0 0.0
        %741 = vmatprep.subr.mxu0 0.0
        %742 = vmatpush1.msra.mxu0 0.0
        %743 = vmatprep.subr.mxu0 0.0
        %744 = vmatpush1.msra.mxu0 0.0
        %745 = vmatprep.subr.mxu0 0.0
        %746 = vmatpush1.msra.mxu0 0.0
        %747 = vmatprep.subr.mxu0 0.0
        %748 = vmatpush1.msra.mxu0 0.0
        %749 = vmatprep.subr.mxu0 0.0
        %750 = vmatpush1.msra.mxu0 0.0
        %751 = vmatprep.subr.mxu0 0.0
        %752 = vmatpush1.msra.mxu0 0.0
        %753 = vmatprep.subr.mxu0 0.0
        %754 = vmatpush1.msra.mxu0 0.0
        %755 = vmatprep.subr.mxu0 0.0
        %756 = vmatpush1.msra.mxu0 0.0
        %757 = vmatprep.subr.mxu0 0.0
        %758 = vmatpush1.msra.mxu0 0.0
        %759 = vmatprep.subr.mxu0 0.0
        %760 = vmatpush1.msra.mxu0 0.0
        %761 = vmatprep.subr.mxu0 0.0
        %762 = vmatpush1.msra.mxu0 0.0
        %763 = vmatprep.subr.mxu0 0.0
        %764 = vmatpush1.msra.mxu0 0.0
        %765 = vmatprep.mubr.f32.mxu0 0.0
        %766 = vmatmul.mubr.f32.gmra.mrb[0].mxu0 %v693
        %v767 = vpop.f32.mrb[0].mxu0
        %v768 = vadd.f32 %v690, %v767
        %v769 = vpop.f32.mrb[0].mxu0
        %v770 = vadd.f32 %v690, %v769
        %771 = vdwg.mxu0
        %772 = vst [vmem:[%s282] sm:$0xff] %v768
        %773 = vst [vmem:[%s282 + $0x8] sm:$0xff] %v770
        %s774 = sand.u32 %s163, 1
        %s775 = scalar_lea.sflag [#allocation4], %s774
        %s776 = sand.u32 %s163, 1
        %s777 = smul.addr %s776, 16
        %s778 = scalar_lea.vmem [#allocation7], %s777
        // Predicated region
        $region53: #{tpu_custom_call.1} parent=43 // pred_check
          %p779 = pneg %p173
        $region54: #{tpu_custom_call.1} parent=43 // pred_check_branch
          %781 = sbr.rel (%p779) target = $region56
        $region55: #{tpu_custom_call.1} parent=43 // pred_region
          %s783 = ssub.s32 256, 256
          %784 = vsyncadd %s775, %s783
          %s785 = smul.addr %s24, 2
          %s786 = smul.addr %s785, 128
          %s787 = scalar_lea.hbm %s6, %s786
          %s789 = sshll.u32 %s778, 4
          %s790 = int_to_ptr.vmem [resolvable:$true] %s789
          %792 = dma.vmem_to_hbm [thread:$0]  %s790, 256, %s787, %s775
        $region56: #{tpu_custom_call.1} parent=43 // pred_fallthru
          _
      $region44: #{tpu_custom_call.1} parent=5 // pred_fallthru
        _
      %p793 = scmp.le.s32.totalorder 2, %s19
      // Predicated region
      $region57: #{tpu_custom_call.1} parent=5 // pred_check
        %p794 = pneg %p793
      $region58: #{tpu_custom_call.1} parent=5 // pred_check_branch
        %796 = sbr.rel (%p794) target = $region60
      $region59: #{tpu_custom_call.1} parent=5 // pred_region
        %s797 = ssub.s32 %s19, 2
        // Predicated region
        $region61: #{tpu_custom_call.1} parent=59 // pred_check
          %p798 = pneg %p179
        $region62: #{tpu_custom_call.1} parent=59 // pred_check_branch
          %800 = sbr.rel (%p798) target = $region64
        $region63: #{tpu_custom_call.1} parent=59 // pred_region
          %s801 = sand.u32 %s164, 1
          %s802 = scalar_lea.sflag [#allocation4], %s801
          %s803 = sand.u32 %s164, 1
          %s804 = smul.addr %s803, 16
          %s805 = scalar_lea.vmem [#allocation7], %s804
          %806 = dma.done %s802, 256
        $region64: #{tpu_custom_call.1} parent=59 // pred_fallthru
          _
      $region60: #{tpu_custom_call.1} parent=5 // pred_fallthru
        _
    $region6: #{tpu_custom_call.1} parent=1 // loop_footer
      %s23 = sadd.s32 1, %s19
    $region7: #{tpu_custom_call.1} parent=1 // loop_footer_branch
      %18 = sbr.rel target = $region3
    $region8: #{tpu_custom_call.1} parent=1 // loop_exit
      _
    %807 = vsyncpa [#allocation3], 1
    %s808 = scalar_lea.sflag [#allocation3], 1
    %809 = vsyncpa %s808, 1
    %810 = vsyncpa [#allocation6], 1
    %811 = vsyncpa [#allocation4], 1
    %s812 = scalar_lea.sflag [#allocation4], 1
    %813 = vsyncpa %s812, 1

</llo_original>
